<compile_context>
chip_gen: v7x
topology: tpu7x:2x2x1
jax: 0.10.0
libtpu: 0.0.40
codegen_flags: <defaults>
</compile_context>

<pallas_src>
import jax
import jax.numpy as jnp
from jax.experimental import pallas as pl
from jax.experimental.pallas import tpu as pltpu


# ----------------------------------------------------------------------------
# Kernel
# ----------------------------------------------------------------------------
def battaglia_kernel(scale_ref, invxc_ref, beta_ref, r_ref, o_ref):
    """Pure streaming elementwise body.

    scale_ref, invxc_ref, beta_ref : SMEM, shape [B]  (scalar prefetch)
        scale  = P200c * P0   (per batch element)
        invxc  = 1 / xc
        beta   = beta
    r_ref, o_ref                   : VMEM, shape [1, T_rows, L]
    """
    b = pl.program_id(0)
    scale = scale_ref[b]
    inv_xc = invxc_ref[b]
    beta = beta_ref[b]

    # rr = r / xc + 0.001  ->  multiply by precomputed reciprocal
    rr = r_ref[...] * inv_xc + 0.001

    # P200c * P0 * rr^(-0.3) * (1 + rr)^(-beta), fused into a single exp
    o_ref[...] = scale * jnp.exp(-0.3 * jnp.log(rr) - beta * jnp.log(1.0 + rr))


# ----------------------------------------------------------------------------
# Layout / tiling choice
# ----------------------------------------------------------------------------
def _choose_layout(nvecs):
    """Pick a lane-dense layout [Nrows, L] and a row-tile T_rows."""
    lane = None
    for cand in (2048, 1024, 512, 256, 128):
        if nvecs % cand == 0:
            lane = cand
            break
    if lane is None:
        raise ValueError("Nvecs must be a multiple of 128 for this layout")
    nrows = nvecs // lane

    # Target ~2 MiB per f32 block per array (2 arrays x 2 buffers ~= 8 MiB,
    # well under the scoped-VMEM default on v5e/v6e/v7x).
    max_elems = (2 * 1024 * 1024) // 4
    max_rows = max(1, max_elems // lane)

    if nrows <= max_rows:
        t_rows = nrows                      # full extent along the row axis
    else:
        t_rows = (max_rows // 8) * 8        # multiple of 8 (sublane constraint)
        t_rows = max(8, t_rows)
    return lane, nrows, t_rows


# ----------------------------------------------------------------------------
# Wrapper
# ----------------------------------------------------------------------------
def network_batt12_forward(M200c, r, P200c, params):
    """
    M200c  : [batch]            float32
    r      : [batch, Nvecs, 1]  float32  (normalized by R200c, > 0)
    P200c  : [batch]            float32
    params : [6]                float32  (A_P0, am_P0, A_xc, am_xc, A_beta, am_beta)

    Returns thermal pressure at r, shape [batch, Nvecs, 1].
    """
    B, Nvecs, one = r.shape
    assert one == 1

    M200c = M200c.astype(jnp.float32)
    P200c = P200c.astype(jnp.float32)
    params = params.astype(jnp.float32)

    # Per-batch scalar setup (hoisted out of the kernel): B scalar ops in XLA.
    A_P0, am_P0, A_xc, am_xc, A_beta, am_beta = (params[i] for i in range(6))
    base = 0.7 * M200c / 10000.0
    P0 = A_P0 * base ** am_P0
    xc = A_xc * base ** am_xc
    beta = A_beta * base ** am_beta
    scale = P200c * P0            # SCALE_PTH = False -> multiply by P200c
    inv_xc = 1.0 / xc

    lane, nrows, t_rows = _choose_layout(Nvecs)
    r2 = r.reshape(B, nrows, lane).astype(jnp.float32)
    grid_rows = pl.cdiv(nrows, t_rows)

    cost = pl.CostEstimate(
        flops=5 * B * Nvecs,
        transcendentals=3 * B * Nvecs,
        bytes_accessed=8 * B * Nvecs,
    )

    out = pl.pallas_call(
        battaglia_kernel,
        out_shape=jax.ShapeDtypeStruct((B, nrows, lane), jnp.float32),
        grid_spec=pltpu.PrefetchScalarGridSpec(
            num_scalar_prefetch=3,          # scale, inv_xc, beta -> SMEM
            grid=(B, grid_rows),
            in_specs=[
                pl.BlockSpec((1, t_rows, lane), lambda b, t, *_: (b, t, 0)),
            ],
            out_specs=pl.BlockSpec((1, t_rows, lane), lambda b, t, *_: (b, t, 0)),
        ),
        compiler_params=pltpu.CompilerParams(
            dimension_semantics=("parallel", "parallel"),
        ),
        cost_estimate=cost,
    )(scale, inv_xc, beta, r2)

    return out.reshape(B, Nvecs, 1)


# ----------------------------------------------------------------------------
# Pure-JAX reference (mirrors the PyTorch forward, SCALE_PTH = False)
# ----------------------------------------------------------------------------
def ref_forward(M200c, r, P200c, params):
    A_P0, am_P0, A_xc, am_xc, A_beta, am_beta = [params[i] for i in range(6)]
    base = 0.7 * M200c / 10000.0
    P0 = A_P0 * base ** am_P0
    xc = A_xc * base ** am_xc
    beta = A_beta * base ** am_beta
    rr = r / xc[:, None, None] + 0.001
    return (P200c[:, None, None] * P0[:, None, None]
            * rr ** (-0.3) * (1.0 + rr) ** (-beta[:, None, None]))


# ----------------------------------------------------------------------------
# Main
# ----------------------------------------------------------------------------
if __name__ == "__main__":
    key = jax.random.PRNGKey(0)
    k1, k2, k3 = jax.random.split(key, 3)

    B = 2
    NVECS = 256  # must be a multiple of 128 for the lane-dense layout

    # Deterministic parameter init (values from NetworkBatt12.__init__).
    params = jnp.array(
        [3.9183, 0.5705, 2.8859, -0.813, 13.8758, -0.6282], dtype=jnp.float32
    )

    # Halo masses ~ 1e3 .. 1e5 (in 1e10 Msun-ish units), positive pressures,
    # radii normalized by R200c in (0.05, 2.0).
    M200c = jax.random.uniform(k1, (B,), jnp.float32, 1.0e3, 1.0e5)
    P200c = jax.random.uniform(k2, (B,), jnp.float32, 0.5, 5.0)
    r = jax.random.uniform(k3, (B, NVECS, 1), jnp.float32, 0.05, 2.0)

    out = network_batt12_forward(M200c, r, P200c, params)
    out = jax.block_until_ready(out)

    ref = ref_forward(M200c, r, P200c, params)
    assert out.shape == r.shape
    assert jnp.allclose(out, ref, rtol=1e-5, atol=1e-6), (
        float(jnp.max(jnp.abs(out - ref))))

    print("KERNEL_OK")
</pallas_src>

<mosaic_0001>
module attributes {stable_mosaic.version = 11 : i64} {
  func.func @battaglia_kernel(%arg0: i32, %arg1: i32, %arg2: memref<2xf32, #tpu.memory_space<smem>>, %arg3: memref<2xf32, #tpu.memory_space<smem>>, %arg4: memref<2xf32, #tpu.memory_space<smem>>, %arg5: memref<1x1x256xf32, #tpu.memory_space<vmem>>, %arg6: memref<1x1x256xf32, #tpu.memory_space<vmem>>) attributes {dimension_semantics = [#tpu.dimension_semantics<parallel>, #tpu.dimension_semantics<parallel>], iteration_bounds = array<i64: 2, 1>, scalar_prefetch = 3 : i64, scratch_operands = 0 : i64, tpu.core_type = #tpu.core_type<tc>, window_params = [{transform_indices = @transform_0, window_bounds = array<i64: 1, 1, 256>}, {transform_indices = @transform_1, window_bounds = array<i64: 1, 1, 256>}]} {
    %0 = arith.index_cast %arg0 : i32 to index
    %1 = memref.load %arg2[%0] : memref<2xf32, #tpu.memory_space<smem>>
    %2 = arith.index_cast %arg0 : i32 to index
    %3 = memref.load %arg3[%2] : memref<2xf32, #tpu.memory_space<smem>>
    %4 = arith.index_cast %arg0 : i32 to index
    %5 = memref.load %arg4[%4] : memref<2xf32, #tpu.memory_space<smem>>
    %c0 = arith.constant 0 : index
    %c0_0 = arith.constant 0 : index
    %c0_1 = arith.constant 0 : index
    %6 = vector.load %arg5[%c0, %c0_0, %c0_1] : memref<1x1x256xf32, #tpu.memory_space<vmem>>, vector<1x1x256xf32>
    %7 = vector.broadcast %3 : f32 to vector<1x1x256xf32>
    %8 = arith.mulf %6, %7 : vector<1x1x256xf32>
    %cst = arith.constant 1.000000e-03 : f32
    %9 = vector.broadcast %cst : f32 to vector<1x1x256xf32>
    %10 = arith.addf %8, %9 : vector<1x1x256xf32>
    %11 = math.log %10 : vector<1x1x256xf32>
    %cst_2 = arith.constant -3.000000e-01 : f32
    %12 = vector.broadcast %cst_2 : f32 to vector<1x1x256xf32>
    %13 = arith.mulf %12, %11 : vector<1x1x256xf32>
    %cst_3 = arith.constant 1.000000e+00 : f32
    %14 = vector.broadcast %cst_3 : f32 to vector<1x1x256xf32>
    %15 = arith.addf %14, %10 : vector<1x1x256xf32>
    %16 = math.log %15 : vector<1x1x256xf32>
    %17 = vector.broadcast %5 : f32 to vector<1x1x256xf32>
    %18 = arith.mulf %17, %16 : vector<1x1x256xf32>
    %19 = arith.subf %13, %18 : vector<1x1x256xf32>
    %20 = math.exp %19 : vector<1x1x256xf32>
    %21 = vector.broadcast %1 : f32 to vector<1x1x256xf32>
    %22 = arith.mulf %21, %20 : vector<1x1x256xf32>
    %c0_4 = arith.constant 0 : index
    %c0_5 = arith.constant 0 : index
    %c0_6 = arith.constant 0 : index
    %23 = vector.load %arg6[%c0_4, %c0_5, %c0_6] : memref<1x1x256xf32, #tpu.memory_space<vmem>>, vector<1x1x256xf32>
    tpu.vector_store %arg6[%c0_4, %c0_5, %c0_6], %22 {strides = array<i32>} : memref<1x1x256xf32, #tpu.memory_space<vmem>>, vector<1x1x256xf32>,
    return
  }
  func.func @transform_0(%arg0: i32, %arg1: i32, %arg2: memref<2xf32, #tpu.memory_space<smem>>, %arg3: memref<2xf32, #tpu.memory_space<smem>>, %arg4: memref<2xf32, #tpu.memory_space<smem>>) -> (i32, i32, i32) {
    %c0_i32 = arith.constant 0 : i32
    %c0_i32_0 = arith.constant 0 : i32
    return %arg0, %arg1, %c0_i32 : i32, i32, i32
  }
  func.func @transform_1(%arg0: i32, %arg1: i32, %arg2: memref<2xf32, #tpu.memory_space<smem>>, %arg3: memref<2xf32, #tpu.memory_space<smem>>, %arg4: memref<2xf32, #tpu.memory_space<smem>>) -> (i32, i32, i32) {
    %c0_i32 = arith.constant 0 : i32
    %c0_i32_0 = arith.constant 0 : i32
    return %arg0, %arg1, %c0_i32 : i32, i32, i32
  }
}

</mosaic_0001>

<llo_original>
// kernel: tpu_custom_call.1
$region0: #{tpu_custom_call.1}
  #allocation0 [shape = 'u32[]', space=smem, size = 0x4, offset = 0x4, fixed_abs, tag = 'smem constant byte address 0x4 - core index']
  #allocation1 [shape = 'u32[144,128]{1,0:T(1,128)}', space=vmem, size = 0x12000, scoped, tag = 'internal scratch']
  #allocation2 [shape = 's32[1]{0}', space=sflag, size = 0x4, scoped, tag = 'scoped memory for tpu_custom_call.1']
  #allocation3 [shape = 'u8[512]{0}', space=smem, size = 0x200, scoped, tag = 'prefetched SMEM operand 0']
  #allocation4 [shape = 'u8[512]{0}', space=smem, size = 0x200, scoped, tag = 'prefetched SMEM operand 1']
  #allocation5 [shape = 'u8[512]{0}', space=smem, size = 0x200, scoped, tag = 'prefetched SMEM operand 2']
  %s0 = inlined_call_operand.hbm [shape: f32[2], index: 0, kind: input, shape index: {}]
  %s1 = inlined_call_operand.vmem [shape: f32[2], index: 1, kind: input, shape index: {}]
  %s2 = inlined_call_operand.vmem [shape: f32[2], index: 2, kind: input, shape index: {}]
  %s3 = inlined_call_operand.vmem [shape: f32[2,1,256], index: 3, kind: input, shape index: {}]
  %s4 = inlined_call_operand.hbm [shape: f32[2,1,256], index: 4, kind: output, shape index: {}]
  %s5 = sld [smem:[#allocation0]]
  $region37: #{tpu_custom_call.1} parent=0
    _
  %s7 = ssub.s32 1, %s5
  %s8 = scalar_select 0, %s7, %s5
  %10 = dma.hbm_to_smem %s0, 16, [#allocation3], [#allocation2]
  %s11 = sshll.u32 %s1, 4
  %s12 = int_to_ptr.vmem [resolvable:$true] %s11
  %14 = dma.vmem_to_smem %s12, 16, [#allocation4], [#allocation2]
  %s15 = sshll.u32 %s2, 4
  %s16 = int_to_ptr.vmem [resolvable:$true] %s15
  %18 = dma.vmem_to_smem %s16, 16, [#allocation5], [#allocation2]
  %19 = dma.done [#allocation2], 48
  %20 = sfence
  $region1: #{tpu_custom_call.1} parent=0
    #allocation6 [shape = 'u8[2048]{0}', space=vmem, size = 0x800, scoped, tag = 'output window, operand 0']
    #allocation7 [shape = 's32[2]{0}', space=sflag, size = 0x8, scoped, tag = 'scoped memory for tpu_custom_call.1']
    %21 = vsyncpa [#allocation7], 0
    %s22 = scalar_lea.sflag [#allocation7], 1
    %23 = vsyncpa %s22, 0
    loop: start=0, step=1, limit=4
    $region2: #{tpu_custom_call.1} parent=1 // loop_pre_header
      _
    $region3: #{tpu_custom_call.1} parent=1 // loop_header
      %s25 = sphi 0, %s29
      %p26 = scmp.ge.s32.totalorder %s25, 4
      %s32 = sphi 0, %s44
      %s33 = sphi 0, %s40
      %s34 = sphi 0, %s32
      %s35 = sphi 0, %s33
      %s36 = sphi 0, %s34
      %s37 = sphi 0, %s35
      %s49 = sphi 0, %s51
      %s52 = sphi 0, %s49
      %s53 = sphi 0, %s52
      %s69 = sphi 0, %s53
      %s77 = sphi 0, %s79
      %s80 = sphi 0, %s77
      %s81 = sphi 0, %s80
      %s97 = sphi 0, %s81
    $region4: #{tpu_custom_call.1} parent=1 // loop_header_branch
      %28 = sbr.rel (%p26) target = $region8
    $region5: #{tpu_custom_call.1} parent=1 // loop_body
      %s30 = ssub.s32 %s25, 1
      %s31 = ssub.s32 %s25, 2
      %s38 = sadd.s32 1, %s33
      %p39 = scmp.ge.s32.totalorder %s38, 1
      %s40 = scalar_select %p39, 0, %s38
      %s41 = sadd.s32 1, %s32
      %s42 = scalar_select %p39, %s41, %s32
      %p43 = scmp.ge.s32.totalorder %s42, 2
      %s44 = scalar_select %p43, 0, %s42
      %s45 = ssub.s32 %s32, %s44
      %s46 = ssub.s32 %s33, %s40
      %s47 = sor.u32 %s45, %s46
      %p48 = scmp.eq.s32.totalorder %s47, 0
      %s50 = sadd.s32 %s49, 1
      %s51 = scalar_select %p48, %s49, %s50
      %p54 = pneg %p48
      %p55 = scmp.eq.s32.totalorder %s25, 1
      %p56 = por %p54, %p55
      %p57 = scmp.ne.s32.totalorder %s49, %s52
      %p58 = scmp.eq.s32.totalorder %s25, 0
      %p59 = por %p57, %p58
      %p60 = scmp.ne.s32.totalorder %s49, %s52
      %p61 = scmp.eq.s32.totalorder %s30, 1
      %p62 = por %p60, %p61
      %p63 = scmp.ne.s32.totalorder %s52, %s53
      %p64 = scmp.eq.s32.totalorder %s30, 0
      %p65 = por %p63, %p64
      %p66 = scmp.ne.s32.totalorder %s52, %s53
      %p67 = scmp.eq.s32.totalorder %s31, 1
      %p68 = por %p66, %p67
      %p70 = scmp.ne.s32.totalorder %s53, %s69
      %p71 = scmp.eq.s32.totalorder %s31, 0
      %p72 = por %p70, %p71
      %s73 = ssub.s32 %s32, %s44
      %s74 = ssub.s32 %s33, %s40
      %s75 = sor.u32 %s73, %s74
      %p76 = scmp.eq.s32.totalorder %s75, 0
      %s78 = sadd.s32 %s77, 1
      %s79 = scalar_select %p76, %s77, %s78
      %p82 = pneg %p76
      %p83 = scmp.eq.s32.totalorder %s25, 1
      %p84 = por %p82, %p83
      %p85 = scmp.ne.s32.totalorder %s77, %s80
      %p86 = scmp.eq.s32.totalorder %s25, 0
      %p87 = por %p85, %p86
      %p88 = scmp.ne.s32.totalorder %s77, %s80
      %p89 = scmp.eq.s32.totalorder %s30, 1
      %p90 = por %p88, %p89
      %p91 = scmp.ne.s32.totalorder %s80, %s81
      %p92 = scmp.eq.s32.totalorder %s30, 0
      %p93 = por %p91, %p92
      %p94 = scmp.ne.s32.totalorder %s80, %s81
      %p95 = scmp.eq.s32.totalorder %s31, 1
      %p96 = por %p94, %p95
      %p98 = scmp.ne.s32.totalorder %s81, %s97
      %p99 = scmp.eq.s32.totalorder %s31, 0
      %p100 = por %p98, %p99
      %p101 = scmp.le.s32.totalorder 1, %s25
      %p102 = scmp.lt.s32.totalorder %s25, 3
      %p103 = pnand %p101, %p102
      %p104 = pneg %p103
      // Predicated region
      $region9: #{tpu_custom_call.1} parent=5 // pred_check
        _
      $region10: #{tpu_custom_call.1} parent=5 // pred_check_branch
        %106 = sbr.rel (%p103) target = $region12
      $region11: #{tpu_custom_call.1} parent=5 // pred_region
        %s107 = ssub.s32 %s25, 1
      $region12: #{tpu_custom_call.1} parent=5 // pred_fallthru
        _
      %p108 = scmp.lt.s32.totalorder %s25, 2
      // Predicated region
      $region13: #{tpu_custom_call.1} parent=5 // pred_check
        %p109 = pneg %p108
      $region14: #{tpu_custom_call.1} parent=5 // pred_check_branch
        %111 = sbr.rel (%p109) target = $region16
      $region15: #{tpu_custom_call.1} parent=5 // pred_region
        // Predicated region
        $region17: #{tpu_custom_call.1} parent=15 // pred_check
          %p112 = pneg %p59
        $region18: #{tpu_custom_call.1} parent=15 // pred_check_branch
          %114 = sbr.rel (%p112) target = $region20
        $region19: #{tpu_custom_call.1} parent=15 // pred_region
          %p115 = scmp.lt.s32.totalorder %s32, 1
          %s116 = scalar_select %p115, %s32, 1
          %p117 = scmp.lt.s32.totalorder %s33, 0
          %s118 = scalar_select %p117, %s33, 0
          %s119 = smul.addr %s118, 2
          %s120 = smul.addr %s116, 2
          %s121 = sadd.s32 %s119, %s120
          %s122 = scalar_lea.vmem %s3, %s121
        $region20: #{tpu_custom_call.1} parent=15 // pred_fallthru
          _
      $region16: #{tpu_custom_call.1} parent=5 // pred_fallthru
        _
      %p123 = scmp.le.s32.totalorder 1, %s25
      %p124 = scmp.lt.s32.totalorder %s25, 3
      %p125 = pnand %p123, %p124
      %p126 = pneg %p125
      // Predicated region
      $region21: #{tpu_custom_call.1} parent=5 // pred_check
        _
      $region22: #{tpu_custom_call.1} parent=5 // pred_check_branch
        %128 = sbr.rel (%p125) target = $region24
      $region23: #{tpu_custom_call.1} parent=5 // pred_region
        %s129 = ssub.s32 %s25, 1
        %p130 = scmp.lt.s32.totalorder %s34, 1
        %s131 = scalar_select %p130, %s34, 1
        %p132 = scmp.lt.s32.totalorder %s35, 0
        %s133 = scalar_select %p132, %s35, 0
        %s134 = smul.addr %s133, 2
        %s135 = smul.addr %s131, 2
        %s136 = sadd.s32 %s134, %s135
        %s137 = scalar_lea.vmem %s3, %s136
        %p138 = pneg %p65
        %p139 = pneg %p62
        %p140 = pneg %p93
        %p141 = pneg %p90
        %s142 = sand.u32 %s80, 1
        %s143 = scalar_lea.sflag [#allocation7], %s142
        %s144 = sand.u32 %s80, 1
        %s145 = smul.addr %s144, 2
        %s146 = scalar_lea.vmem [#allocation6], %s145
        %p147 = scmp.lt.s32.totalorder %s34, 1
        %s148 = scalar_select %p147, %s34, 1
        %p149 = scmp.lt.s32.totalorder %s35, 0
        %s150 = scalar_select %p149, %s35, 0
        %s151 = smul.addr %s150, 2
        %s152 = smul.addr %s148, 2
        %s153 = sadd.s32 %s151, %s152
        %s154 = scalar_lea.vmem %s3, %s153
        %s155 = sld [smem:[#allocation3 + %s34]]
        %s156 = sld [smem:[#allocation4 + %s34]]
        %s157 = sld [smem:[#allocation5 + %s34]]
        %v158 = vld [vmem:[%s154] sm:$0x3]
        %v159 = vstv %s156
        %v160 = vmul.f32 %v158, %v159
        %v161 = vadd.f32 %v160, 0.001
        %v162 = vlog2.pop %v161
        %v163 = vmul.f32 %v162, 0.6931472
        %v164 = vmul.f32 %v163, -0.3
        %v165 = vadd.f32 %v161, 1.0
        %v166 = vlog2.pop %v165
        %v167 = vmul.f32 %v166, 0.6931472
        %v168 = vstv %s157
        %v169 = vmul.f32 %v168, %v167
        %v170 = vsub.f32 %v164, %v169
        %v171 = vmul.f32 %v170, 1.442695
        %v172 = vpow.pop %v171
        %v173 = vstv %s155
        %v174 = vmul.f32 %v173, %v172
        %v175 = vlaneseq
        %vm176 = vcmp.ge.s32.totalorder %v175, 0
        %vm177 = vcmp.lt.s32.totalorder %v175, 256
        %vm178 = vmand %vm176, %vm177
        %179 = vst.msk [vmem:[%s146] sm:$0x3] %vm178, %v174
        %s180 = sand.u32 %s80, 1
        %s181 = scalar_lea.sflag [#allocation7], %s180
        %s182 = sand.u32 %s80, 1
        %s183 = smul.addr %s182, 2
        %s184 = scalar_lea.vmem [#allocation6], %s183
        // Predicated region
        $region25: #{tpu_custom_call.1} parent=23 // pred_check
          %p185 = pneg %p90
        $region26: #{tpu_custom_call.1} parent=23 // pred_check_branch
          %187 = sbr.rel (%p185) target = $region28
        $region27: #{tpu_custom_call.1} parent=23 // pred_region
          %s189 = ssub.s32 32, 32
          %190 = vsyncadd %s181, %s189
          %s191 = smul.addr %s35, 2
          %s192 = smul.addr %s34, 2
          %s193 = sadd.s32 %s191, %s192
          %s194 = smul.addr %s193, 16
          %s195 = scalar_lea.hbm %s4, %s194
          %s197 = sshll.u32 %s184, 4
          %s198 = int_to_ptr.vmem [resolvable:$true] %s197
          %200 = dma.vmem_to_hbm [thread:$0]  %s198, 32, %s195, %s181
        $region28: #{tpu_custom_call.1} parent=23 // pred_fallthru
          _
      $region24: #{tpu_custom_call.1} parent=5 // pred_fallthru
        _
      %p201 = scmp.le.s32.totalorder 2, %s25
      // Predicated region
      $region29: #{tpu_custom_call.1} parent=5 // pred_check
        %p202 = pneg %p201
      $region30: #{tpu_custom_call.1} parent=5 // pred_check_branch
        %204 = sbr.rel (%p202) target = $region32
      $region31: #{tpu_custom_call.1} parent=5 // pred_region
        %s205 = ssub.s32 %s25, 2
        // Predicated region
        $region33: #{tpu_custom_call.1} parent=31 // pred_check
          %p206 = pneg %p96
        $region34: #{tpu_custom_call.1} parent=31 // pred_check_branch
          %208 = sbr.rel (%p206) target = $region36
        $region35: #{tpu_custom_call.1} parent=31 // pred_region
          %s209 = sand.u32 %s81, 1
          %s210 = scalar_lea.sflag [#allocation7], %s209
          %s211 = sand.u32 %s81, 1
          %s212 = smul.addr %s211, 2
          %s213 = scalar_lea.vmem [#allocation6], %s212
          %214 = dma.done %s210, 32
        $region36: #{tpu_custom_call.1} parent=31 // pred_fallthru
          _
      $region32: #{tpu_custom_call.1} parent=5 // pred_fallthru
        _
    $region6: #{tpu_custom_call.1} parent=1 // loop_footer
      %s29 = sadd.s32 1, %s25
    $region7: #{tpu_custom_call.1} parent=1 // loop_footer_branch
      %24 = sbr.rel target = $region3
    $region8: #{tpu_custom_call.1} parent=1 // loop_exit
      _
    %215 = vsyncpa [#allocation7], 1
    %s216 = scalar_lea.sflag [#allocation7], 1
    %217 = vsyncpa %s216, 1

</llo_original>
